<compile_context>
chip_gen: v5e
topology: v5e:2x2
jax: 0.10.0
libtpu: 0.0.40
codegen_flags: <defaults>
</compile_context>

<pallas_src>
import functools

import jax
import jax.numpy as jnp
from jax.experimental import pallas as pl
from jax.experimental.pallas import tpu as pltpu


_LANE = 128


def _focal_loss_kernel(x_ref, t_ref, w_ref, o_ref, *, alpha, gamma):
    x = x_ref[...]            # (br, 128) logits
    t = t_ref[...]            # (br, 128) one-hot targets
    w = w_ref[...]            # (br, 128) anchor-wise weights (same layout)

    # One shared exponential for sigmoid and the stable BCE term.
    e = jnp.exp(-jnp.abs(x))                       # exp(-|x|)
    s_pos = 1.0 / (1.0 + e)                        # sigmoid(|x|)
    sig = jnp.where(x >= 0.0, s_pos, e * s_pos)    # sigmoid(x), no cancellation

    # sigmoid_cross_entropy_with_logits: max(x,0) - x*t + log1p(exp(-|x|))
    bce = jnp.maximum(x, 0.0) - x * t + jnp.log1p(e)

    alpha_w = t * alpha + (1.0 - t) * (1.0 - alpha)
    # pt = t*(1-sig) + (1-t)*sig  ==  sig + t*(1 - 2*sig)
    pt = sig + t * (1.0 - 2.0 * sig)

    g = float(gamma)
    if g == 2.0:
        pt_pow = pt * pt                           # avoid exp/log pow on EUP
    elif g == 1.0:
        pt_pow = pt
    elif g == 0.0:
        pt_pow = jnp.ones_like(pt)
    elif g.is_integer() and g > 0.0:
        pt_pow = pt
        for _ in range(int(g) - 1):
            pt_pow = pt_pow * pt
    else:
        pt_pow = jnp.power(pt, g)                  # non-integer gamma fallback

    o_ref[...] = alpha_w * pt_pow * bce * w


def sigmoid_focal_classification_loss(
    logits, target, weights, *, gamma=2.0, alpha=0.25, block_rows=2048
):
    """JAX/Pallas port of SigmoidFocalClassificationLoss.forward.

    logits, target: (B, P, C=1) float32
    weights:        (B, P)      float32
    returns:        (B, P) float32 (matching torch's loss.squeeze(-1) * weights)
    """
    B, P, C = logits.shape
    assert weights.shape == (B, P)
    # Mirror the PyTorch assert: loss.squeeze(-1) must have weights' ndim ⇒ C == 1.
    assert C == 1, "weights ndim must match loss ndim after squeeze(-1) (C must be 1)"

    N = B * P

    x = logits.reshape(N)
    t = target.reshape(N)
    w = weights.reshape(N)

    rem = N % _LANE
    if rem:
        # Rare ragged-lane fallback: small flat pad up to the next lane multiple.
        pad = _LANE - rem
        x = jnp.pad(x, (0, pad))
        t = jnp.pad(t, (0, pad))
        w = jnp.pad(w, (0, pad))

    R = x.shape[0] // _LANE
    x2 = x.reshape(R, _LANE)
    t2 = t.reshape(R, _LANE)
    w2 = w.reshape(R, _LANE)

    # Block row count: full array if small, otherwise a multiple of 8.
    block_rows = max(8, (int(block_rows) // 8) * 8)
    br = R if R <= block_rows else block_rows
    grid = (pl.cdiv(R, br),)

    kernel = functools.partial(
        _focal_loss_kernel, alpha=float(alpha), gamma=float(gamma)
    )

    total_elems = R * _LANE
    cost = pl.CostEstimate(
        flops=15 * total_elems,
        transcendentals=3 * total_elems,
        bytes_accessed=4 * 4 * total_elems,   # 3 inputs + 1 output, f32
    )

    out2 = pl.pallas_call(
        kernel,
        out_shape=jax.ShapeDtypeStruct((R, _LANE), logits.dtype),
        grid=grid,
        in_specs=[
            pl.BlockSpec((br, _LANE), lambda i: (i, 0)),
            pl.BlockSpec((br, _LANE), lambda i: (i, 0)),
            pl.BlockSpec((br, _LANE), lambda i: (i, 0)),
        ],
        out_specs=pl.BlockSpec((br, _LANE), lambda i: (i, 0)),
        compiler_params=pltpu.CompilerParams(
            dimension_semantics=("parallel",)
        ),
        cost_estimate=cost,
    )(x2, t2, w2)

    return out2.reshape(-1)[:N].reshape(B, P)


def _reference(logits, target, weights, gamma=2.0, alpha=0.25):
    """Pure-JAX transliteration of the PyTorch forward (for correctness check)."""
    pred_sigmoid = jax.nn.sigmoid(logits)
    alpha_weight = target * alpha + (1 - target) * (1 - alpha)
    pt = target * (1.0 - pred_sigmoid) + (1 - target) * pred_sigmoid
    focal_weight = alpha_weight * jnp.power(pt, gamma)
    bce = jnp.maximum(logits, 0.0) - logits * target + jnp.log1p(
        jnp.exp(-jnp.abs(logits))
    )
    loss = jnp.squeeze(focal_weight * bce, -1)
    return loss * weights


if __name__ == "__main__":
    # Small shapes consistent with the module: (B, #proposals, #classes=1)
    B, P, C = 2, 512, 1
    key = jax.random.PRNGKey(0)
    k1, k2, k3 = jax.random.split(key, 3)

    logits = jax.random.normal(k1, (B, P, C), dtype=jnp.float32)
    target = jax.random.bernoulli(k2, 0.3, (B, P, C)).astype(jnp.float32)
    weights = jax.random.uniform(k3, (B, P), dtype=jnp.float32)

    out = sigmoid_focal_classification_loss(logits, target, weights)
    out = jax.block_until_ready(out)

    ref = _reference(logits, target, weights)
    assert out.shape == (B, P)
    assert jnp.allclose(out, ref, atol=1e-5, rtol=1e-5)

    print("KERNEL_OK")
</pallas_src>

<mosaic_0001>
module attributes {stable_mosaic.version = 11 : i64} {
  func.func @_focal_loss_kernel(%arg0: i32, %arg1: memref<8x128xf32, #tpu.memory_space<vmem>>, %arg2: memref<8x128xf32, #tpu.memory_space<vmem>>, %arg3: memref<8x128xf32, #tpu.memory_space<vmem>>, %arg4: memref<8x128xf32, #tpu.memory_space<vmem>>) attributes {dimension_semantics = [#tpu.dimension_semantics<parallel>], iteration_bounds = array<i64: 1>, scalar_prefetch = 0 : i64, scratch_operands = 0 : i64, tpu.core_type = #tpu.core_type<tc>, window_params = [{transform_indices = @transform_0, window_bounds = array<i64: 8, 128>}, {transform_indices = @transform_1, window_bounds = array<i64: 8, 128>}, {transform_indices = @transform_2, window_bounds = array<i64: 8, 128>}, {transform_indices = @transform_3, window_bounds = array<i64: 8, 128>}]} {
    %c0 = arith.constant 0 : index
    %c0_0 = arith.constant 0 : index
    %0 = vector.load %arg1[%c0, %c0_0] : memref<8x128xf32, #tpu.memory_space<vmem>>, vector<8x128xf32>
    %c0_1 = arith.constant 0 : index
    %c0_2 = arith.constant 0 : index
    %1 = vector.load %arg2[%c0_1, %c0_2] : memref<8x128xf32, #tpu.memory_space<vmem>>, vector<8x128xf32>
    %c0_3 = arith.constant 0 : index
    %c0_4 = arith.constant 0 : index
    %2 = vector.load %arg3[%c0_3, %c0_4] : memref<8x128xf32, #tpu.memory_space<vmem>>, vector<8x128xf32>
    %3 = math.absf %0 : vector<8x128xf32>
    %cst = arith.constant 0.000000e+00 : f32
    %4 = vector.broadcast %cst : f32 to vector<8x128xf32>
    %5 = arith.subf %4, %3 : vector<8x128xf32>
    %6 = math.exp %5 : vector<8x128xf32>
    %cst_5 = arith.constant 1.000000e+00 : f32
    %7 = vector.broadcast %cst_5 : f32 to vector<8x128xf32>
    %8 = arith.addf %7, %6 : vector<8x128xf32>
    %cst_6 = arith.constant 1.000000e+00 : f32
    %9 = vector.broadcast %cst_6 : f32 to vector<8x128xf32>
    %10 = arith.divf %9, %8 : vector<8x128xf32>
    %cst_7 = arith.constant 0.000000e+00 : f32
    %11 = vector.broadcast %cst_7 : f32 to vector<8x128xf32>
    %12 = arith.cmpf oge, %0, %11 : vector<8x128xf32>
    %13 = arith.mulf %6, %10 : vector<8x128xf32>
    %14 = arith.select %12, %10, %13 : vector<8x128xi1>, vector<8x128xf32>
    %cst_8 = arith.constant 0.000000e+00 : f32
    %15 = vector.broadcast %cst_8 : f32 to vector<8x128xf32>
    %16 = arith.maximumf %0, %15 : vector<8x128xf32>
    %17 = arith.mulf %0, %1 : vector<8x128xf32>
    %18 = arith.subf %16, %17 : vector<8x128xf32>
    %19 = math.log1p %6 : vector<8x128xf32>
    %20 = arith.addf %18, %19 : vector<8x128xf32>
    %cst_9 = arith.constant 2.500000e-01 : f32
    %21 = vector.broadcast %cst_9 : f32 to vector<8x128xf32>
    %22 = arith.mulf %1, %21 : vector<8x128xf32>
    %cst_10 = arith.constant 1.000000e+00 : f32
    %23 = vector.broadcast %cst_10 : f32 to vector<8x128xf32>
    %24 = arith.subf %23, %1 : vector<8x128xf32>
    %cst_11 = arith.constant 7.500000e-01 : f32
    %25 = vector.broadcast %cst_11 : f32 to vector<8x128xf32>
    %26 = arith.mulf %24, %25 : vector<8x128xf32>
    %27 = arith.addf %22, %26 : vector<8x128xf32>
    %cst_12 = arith.constant 2.000000e+00 : f32
    %28 = vector.broadcast %cst_12 : f32 to vector<8x128xf32>
    %29 = arith.mulf %28, %14 : vector<8x128xf32>
    %cst_13 = arith.constant 1.000000e+00 : f32
    %30 = vector.broadcast %cst_13 : f32 to vector<8x128xf32>
    %31 = arith.subf %30, %29 : vector<8x128xf32>
    %32 = arith.mulf %1, %31 : vector<8x128xf32>
    %33 = arith.addf %14, %32 : vector<8x128xf32>
    %34 = arith.mulf %33, %33 : vector<8x128xf32>
    %35 = arith.mulf %27, %34 : vector<8x128xf32>
    %36 = arith.mulf %35, %20 : vector<8x128xf32>
    %37 = arith.mulf %36, %2 : vector<8x128xf32>
    %c0_14 = arith.constant 0 : index
    %c0_15 = arith.constant 0 : index
    %38 = vector.load %arg4[%c0_14, %c0_15] : memref<8x128xf32, #tpu.memory_space<vmem>>, vector<8x128xf32>
    tpu.vector_store %arg4[%c0_14, %c0_15], %37 {strides = array<i32>} : memref<8x128xf32, #tpu.memory_space<vmem>>, vector<8x128xf32>,
    return
  }
  func.func @transform_0(%arg0: i32) -> (i32, i32) {
    %c0_i32 = arith.constant 0 : i32
    %c0_i32_0 = arith.constant 0 : i32
    return %arg0, %c0_i32 : i32, i32
  }
  func.func @transform_1(%arg0: i32) -> (i32, i32) {
    %c0_i32 = arith.constant 0 : i32
    %c0_i32_0 = arith.constant 0 : i32
    return %arg0, %c0_i32 : i32, i32
  }
  func.func @transform_2(%arg0: i32) -> (i32, i32) {
    %c0_i32 = arith.constant 0 : i32
    %c0_i32_0 = arith.constant 0 : i32
    return %arg0, %c0_i32 : i32, i32
  }
  func.func @transform_3(%arg0: i32) -> (i32, i32) {
    %c0_i32 = arith.constant 0 : i32
    %c0_i32_0 = arith.constant 0 : i32
    return %arg0, %c0_i32 : i32, i32
  }
}

</mosaic_0001>

<llo_original>
// kernel: tpu_custom_call.1
$region0: #{tpu_custom_call.1}
  #allocation0 [shape = 'u32[]', space=smem, size = 0x4, offset = 0x4, fixed_abs, tag = 'smem constant byte address 0x4 - core index']
  #allocation1 [shape = 'u32[72,128]{1,0:T(1,128)}', space=vmem, size = 0x9000, scoped, tag = 'internal scratch']
  %s0 = inlined_call_operand.hbm [shape: f32[8,128], index: 0, kind: input, shape index: {}]
  %s1 = inlined_call_operand.hbm [shape: f32[8,128], index: 1, kind: input, shape index: {}]
  %s2 = inlined_call_operand.hbm [shape: f32[8,128], index: 2, kind: input, shape index: {}]
  %s3 = inlined_call_operand.hbm [shape: f32[8,128], index: 3, kind: output, shape index: {}]
  %s4 = sld [smem:[#allocation0]]
  $region34: #{tpu_custom_call.1} parent=0
    _
  %s6 = ssub.s32 1, %s4
  %s7 = scalar_select 0, %s6, %s4
  $region1: #{tpu_custom_call.1} parent=0
    #allocation2 [shape = 'u8[4096]{0}', space=vmem, size = 0x1000, scoped, tag = 'input window, operand 0, single buffered']
    #allocation3 [shape = 's32[1]{0}', space=sflag, size = 0x4, scoped, tag = 'scoped memory for tpu_custom_call.1']
    #allocation4 [shape = 's32[1]{0}', space=sflag, size = 0x4, scoped, tag = 'scoped memory for tpu_custom_call.1']
    #allocation5 [shape = 'u8[4096]{0}', space=vmem, size = 0x1000, scoped, tag = 'input window, operand 1, single buffered']
    #allocation6 [shape = 's32[1]{0}', space=sflag, size = 0x4, scoped, tag = 'scoped memory for tpu_custom_call.1']
    #allocation7 [shape = 'u8[4096]{0}', space=vmem, size = 0x1000, scoped, tag = 'input window, operand 2, single buffered']
    #allocation8 [shape = 'u8[4096]{0}', space=vmem, size = 0x1000, scoped, tag = 'output window, operand 0, single buffered']
    %8 = vsyncpa [#allocation3], 0
    %9 = vsyncpa [#allocation6], 0
    %10 = vsyncpa [#allocation4], 0
    // Predicated region
    $region2: #{tpu_custom_call.1} parent=1 // pred_check
      _
    $region3: #{tpu_custom_call.1} parent=1 // pred_check_branch
      %12 = sbr.rel (0) target = $region5
    $region4: #{tpu_custom_call.1} parent=1 // pred_region
      %14 = vsyncadd [#allocation3], 0
      %s16 = sshll.u32 %s0, 4
      %s17 = int_to_ptr.hbm [resolvable:$true] %s16
      %s18 = sshll.u32 [#allocation2], 4
      %s19 = int_to_ptr.vmem [resolvable:$true] %s18
      %21 = dma.hbm_to_vmem [thread:$0]  %s17, 128, %s19, [#allocation3]
    $region5: #{tpu_custom_call.1} parent=1 // pred_fallthru
      _
    // Predicated region
    $region6: #{tpu_custom_call.1} parent=1 // pred_check
      _
    $region7: #{tpu_custom_call.1} parent=1 // pred_check_branch
      %23 = sbr.rel (0) target = $region9
    $region8: #{tpu_custom_call.1} parent=1 // pred_region
      %25 = vsyncadd [#allocation6], 0
      %s27 = sshll.u32 %s1, 4
      %s28 = int_to_ptr.hbm [resolvable:$true] %s27
      %s29 = sshll.u32 [#allocation5], 4
      %s30 = int_to_ptr.vmem [resolvable:$true] %s29
      %32 = dma.hbm_to_vmem [thread:$0]  %s28, 128, %s30, [#allocation6]
    $region9: #{tpu_custom_call.1} parent=1 // pred_fallthru
      _
    // Predicated region
    $region10: #{tpu_custom_call.1} parent=1 // pred_check
      _
    $region11: #{tpu_custom_call.1} parent=1 // pred_check_branch
      %34 = sbr.rel (0) target = $region13
    $region12: #{tpu_custom_call.1} parent=1 // pred_region
      %36 = vsyncadd [#allocation6], 0
      %s38 = sshll.u32 %s2, 4
      %s39 = int_to_ptr.hbm [resolvable:$true] %s38
      %s40 = sshll.u32 [#allocation7], 4
      %s41 = int_to_ptr.vmem [resolvable:$true] %s40
      %43 = dma.hbm_to_vmem [thread:$0]  %s39, 128, %s41, [#allocation6]
    $region13: #{tpu_custom_call.1} parent=1 // pred_fallthru
      _
    // Predicated region
    $region14: #{tpu_custom_call.1} parent=1 // pred_check
      _
    $region15: #{tpu_custom_call.1} parent=1 // pred_check_branch
      %45 = sbr.rel (0) target = $region17
    $region16: #{tpu_custom_call.1} parent=1 // pred_region
      %47 = dma.done [#allocation3], 128
    $region17: #{tpu_custom_call.1} parent=1 // pred_fallthru
      _
    // Predicated region
    $region18: #{tpu_custom_call.1} parent=1 // pred_check
      _
    $region19: #{tpu_custom_call.1} parent=1 // pred_check_branch
      %49 = sbr.rel (0) target = $region21
    $region20: #{tpu_custom_call.1} parent=1 // pred_region
      %51 = dma.done [#allocation6], 128
    $region21: #{tpu_custom_call.1} parent=1 // pred_fallthru
      _
    // Predicated region
    $region22: #{tpu_custom_call.1} parent=1 // pred_check
      _
    $region23: #{tpu_custom_call.1} parent=1 // pred_check_branch
      %53 = sbr.rel (0) target = $region25
    $region24: #{tpu_custom_call.1} parent=1 // pred_region
      %55 = dma.done [#allocation6], 128
    $region25: #{tpu_custom_call.1} parent=1 // pred_fallthru
      _
    %v56 = vld [vmem:[#allocation2] sm:$0xff]
    %v57 = vld [vmem:[#allocation5] sm:$0xff]
    %v58 = vld [vmem:[#allocation7] sm:$0xff]
    %v59 = vand.u32 2147483647, %v56
    %v60 = vsub.f32 0.0, %v59
    %v61 = vmul.f32 %v60, 1.442695
    %v62 = vpow.pop %v61
    %v63 = vadd.f32 %v62, 1.0
    %v64 = vrcp.pop %v63
    %v65 = vmul.f32 %v63, %v64
    %v66 = vsub.f32 1.0, %v65
    %v67 = vmul.f32 %v64, %v66
    %v68 = vadd.f32 %v64, %v67
    %vm69 = vweird.f32 %v63
    %vm70 = vweird.f32 %v64
    %vm71 = vmor %vm69, %vm70
    %v72 = vsel %vm71, %v64, %v68
    %v73 = vand.u32 2147483647, %v63
    %vm74 = vcmp.eq.f32.partialorder %v73, 8.507059e+37
    %v75 = vand.u32 %v63, 2147483648
    %v76 = vor.u32 1.1754944e-38, %v75
    %v77 = vsel %vm74, %v76, %v72
    %v78 = vmul.f32 1.0, %v77
    %vm79 = vcmp.ge.f32.partialorder %v56, 0.0
    %v80 = vmul.f32 %v62, %v78
    %v81 = vsel %vm79, %v78, %v80
    %v82 = vmax.f32 %v56, 0.0
    %v83 = vmul.f32 %v56, %v57
    %v84 = vsub.f32 %v82, %v83
    %v85 = vadd.f32 %v62, 1.0
    %v86 = vlog2.pop %v85
    %v87 = vmul.f32 %v86, 0.6931472
    %v88 = vmul.f32 -0.5, %v62
    %v89 = vadd.f32 %v88, 1.0
    %v90 = vmul.f32 %v89, %v62
    %v91 = vand.u32 2147483647, %v62
    %vm92 = vcmp.lt.f32.partialorder %v91, 0.0004427343
    %v93 = vsel %vm92, %v90, %v87
    %v94 = vadd.f32 %v84, %v93
    %v95 = vmul.f32 %v57, 0.25
    %v96 = vsub.f32 1.0, %v57
    %v97 = vmul.f32 %v96, 0.75
    %v98 = vadd.f32 %v95, %v97
    %v99 = vmul.f32 %v81, 2.0
    %v100 = vsub.f32 1.0, %v99
    %v101 = vmul.f32 %v57, %v100
    %v102 = vadd.f32 %v81, %v101
    %v103 = vmul.f32 %v102, %v102
    %v104 = vmul.f32 %v98, %v103
    %v105 = vmul.f32 %v104, %v94
    %v106 = vmul.f32 %v105, %v58
    %107 = vst [vmem:[#allocation8] sm:$0xff] %v106
    // Predicated region
    $region26: #{tpu_custom_call.1} parent=1 // pred_check
      _
    $region27: #{tpu_custom_call.1} parent=1 // pred_check_branch
      %109 = sbr.rel (0) target = $region29
    $region28: #{tpu_custom_call.1} parent=1 // pred_region
      %111 = vsyncadd [#allocation4], 0
      %s113 = sshll.u32 [#allocation8], 4
      %s114 = int_to_ptr.vmem [resolvable:$true] %s113
      %s115 = sshll.u32 %s3, 4
      %s116 = int_to_ptr.hbm [resolvable:$true] %s115
      %118 = dma.vmem_to_hbm [thread:$0]  %s114, 128, %s116, [#allocation4]
    $region29: #{tpu_custom_call.1} parent=1 // pred_fallthru
      _
    // Predicated region
    $region30: #{tpu_custom_call.1} parent=1 // pred_check
      _
    $region31: #{tpu_custom_call.1} parent=1 // pred_check_branch
      %120 = sbr.rel (0) target = $region33
    $region32: #{tpu_custom_call.1} parent=1 // pred_region
      %122 = dma.done [#allocation4], 128
    $region33: #{tpu_custom_call.1} parent=1 // pred_fallthru
      _
    %123 = vsyncpa [#allocation3], 1
    %124 = vsyncpa [#allocation6], 1
    %125 = vsyncpa [#allocation4], 1

</llo_original>
